<compile_context>
chip_gen: v6e
topology: v6e:2x2x1
jax: 0.10.0
libtpu: 0.0.40
codegen_flags: <defaults>
</compile_context>

<pallas_src>
import numpy as np
import jax
import jax.numpy as jnp
from jax.experimental import pallas as pl
from jax.experimental.pallas import tpu as pltpu


# ------------------------------- helpers -------------------------------------
def _round_up(a, m):
    return ((a + m - 1) // m) * m


def _vmem_cap_bytes():
    # ~3/4 of physical VMEM: 96 MiB on v5e/v6e (128 MiB), 48 MiB on v7x (64 MiB/TC).
    try:
        info = pltpu.get_tpu_info()
        cap = int(getattr(info, "vmem_capacity_bytes", 0) or 0)
        if cap > 0:
            return (cap * 3) // 4
    except Exception:
        pass
    return 48 << 20  # conservative fallback, safe on every generation


# ----------------------------- Pallas kernels --------------------------------
def _parallel_linear_kernel(x_ref, w_ref, b_ref, o_ref):
    # x (tile_m, K) @ w (K, tile_n) + b (1, tile_n) -> o (tile_m, tile_n)
    acc = jnp.dot(x_ref[...], w_ref[...], preferred_element_type=jnp.float32)
    o_ref[...] = (acc + b_ref[...]).astype(o_ref.dtype)


def _parallel_linear_kernel_ktiled(x_ref, w_ref, b_ref, o_ref, acc_ref):
    # K-tiled contraction with resident f32 accumulator (P3 pattern).
    k = pl.program_id(2)

    @pl.when(k == 0)
    def _():
        acc_ref[...] = jnp.zeros_like(acc_ref)

    acc_ref[...] += jnp.dot(x_ref[...], w_ref[...],
                            preferred_element_type=jnp.float32)

    @pl.when(k == pl.num_programs(2) - 1)
    def _():
        o_ref[...] = (acc_ref[...] + b_ref[...]).astype(o_ref.dtype)


# ------------------------- parameter fusion (hoisted) -------------------------
def fuse_parallel_params(weights, biases, *, compute_dtype=jnp.float32):
    """Fuse taiyaki Parallel(FeedForward, ...) params into one lane-dense GEMM.

    Do this ONCE at parameter-load time.  Returns (w_fused (K, N_pad),
    b_fused (1, N_pad) f32, n_out) where N_pad is N rounded up to 128 lanes
    (padded weight rows / bias entries are zero).
    """
    w_cat = jnp.concatenate([jnp.asarray(w) for w in weights], axis=0)  # (N, C)
    b_cat = jnp.concatenate([jnp.asarray(b) for b in biases], axis=0)   # (N,)
    n_out = int(w_cat.shape[0])
    n_pad = _round_up(max(n_out, 128), 128)        # lane-dense output width
    if n_pad != n_out:
        w_cat = jnp.pad(w_cat, ((0, n_pad - n_out), (0, 0)))
        b_cat = jnp.pad(b_cat, ((0, n_pad - n_out),))
    w_fused = jnp.transpose(w_cat, (1, 0)).astype(compute_dtype)        # (K, N_pad)
    b_fused = b_cat.reshape(1, n_pad).astype(jnp.float32)
    return w_fused, b_fused, n_out


# ------------------------------ fused forward --------------------------------
def parallel_linear_fused(x, w_fused, b_fused, n_out=None, *,
                          tile_m=512, tile_n=None, tile_k=None,
                          min_pallas_rows=256, min_pallas_k=32):
    """Fused taiyaki Parallel(FeedForward, ...) forward.

    x: (T, B, C); w_fused: (C, N_pad); b_fused: (1, N_pad) f32.
    Returns (T, B, n_out) == torch.cat([x @ W_i.T + b_i for i], dim=2).
    Pass bf16-fused params (fuse_parallel_params(..., compute_dtype=bf16)) to
    halve HBM read traffic on v5e/v6e/v7x (MXU still accumulates in f32; expect
    ~1e-2 relative error vs f32).
    """
    T, B, C = x.shape
    K, n_pad = int(w_fused.shape[0]), int(w_fused.shape[1])
    assert C == K, "x feature dim must match fused weight"
    n_out = n_pad if n_out is None else int(n_out)
    out_dtype = x.dtype
    compute_dtype = w_fused.dtype
    M = T * B

    # Tiny / very skinny problems: XLA's fused einsum beats per-step overhead.
    if M < min_pallas_rows or K < min_pallas_k:
        y = jnp.einsum("tbc,cn->tbn", x.astype(compute_dtype), w_fused,
                       preferred_element_type=jnp.float32) + b_fused
        return y[..., :n_out].astype(out_dtype)

    in_bytes = jnp.dtype(compute_dtype).itemsize
    out_bytes = jnp.dtype(out_dtype).itemsize
    sublane = max(8, 32 // in_bytes)     # 8 f32, 16 bf16, 32 int8/fp8

    # No explicit pad/slice of x or the output: cdiv grid + ragged last block.
    x_flat = x.reshape(M, K).astype(compute_dtype)

    tile_m = min(_round_up(tile_m, sublane), _round_up(M, sublane))
    if tile_n is None:
        tile_n = n_pad if n_pad <= 1024 else next(
            (t for t in (512, 256, 128) if n_pad % t == 0), n_pad)
    else:
        tile_n = min(_round_up(tile_n, 128), n_pad)
    if tile_k is None:
        if K > 2048 and K % 128 == 0:
            tile_k = next((t for t in (512, 256, 128) if K % t == 0), K)
        else:
            tile_k = K
    elif tile_k % 128 != 0 or K % tile_k != 0:
        tile_k = K  # K tiling needs exact, 128-aligned K blocks (contraction dim)

    m_tiles = pl.cdiv(M, tile_m)
    n_tiles = pl.cdiv(n_pad, tile_n)
    k_tiles = max(1, K // tile_k)

    # Double-buffered x/w/b/out tiles (+ accumulator) + 1 MiB headroom.
    vmem_est = 2 * (tile_m * tile_k * in_bytes + tile_k * tile_n * in_bytes
                    + tile_n * 4 + tile_m * tile_n * out_bytes) + (1 << 20)
    if k_tiles > 1:
        vmem_est += tile_m * tile_n * 4
    vmem_limit = int(min(max(vmem_est, 4 << 20), _vmem_cap_bytes()))

    cost = pl.CostEstimate(
        flops=2 * M * K * n_pad,
        bytes_accessed=in_bytes * (M * K + K * n_pad) + 4 * n_pad
                       + out_bytes * M * n_pad,
        transcendentals=0,
    )

    if k_tiles == 1:
        out_flat = pl.pallas_call(
            _parallel_linear_kernel,
            out_shape=jax.ShapeDtypeStruct((M, n_pad), out_dtype),
            grid=(m_tiles, n_tiles),
            in_specs=[
                pl.BlockSpec((tile_m, K), lambda i, j: (i, 0)),   # streamed rows
                pl.BlockSpec((K, tile_n), lambda i, j: (0, j)),   # fused weight
                pl.BlockSpec((1, tile_n), lambda i, j: (0, j)),   # fused bias
            ],
            out_specs=pl.BlockSpec((tile_m, tile_n), lambda i, j: (i, j)),
            compiler_params=pltpu.CompilerParams(
                dimension_semantics=("parallel", "parallel"),
                vmem_limit_bytes=vmem_limit,
            ),
            cost_estimate=cost,
        )(x_flat, w_fused, b_fused)
    else:
        out_flat = pl.pallas_call(
            _parallel_linear_kernel_ktiled,
            out_shape=jax.ShapeDtypeStruct((M, n_pad), out_dtype),
            grid=(m_tiles, n_tiles, k_tiles),
            in_specs=[
                pl.BlockSpec((tile_m, tile_k), lambda i, j, k: (i, k)),
                pl.BlockSpec((tile_k, tile_n), lambda i, j, k: (k, j)),
                pl.BlockSpec((1, tile_n), lambda i, j, k: (0, j)),
            ],
            out_specs=pl.BlockSpec((tile_m, tile_n), lambda i, j, k: (i, j)),
            scratch_shapes=[pltpu.VMEM((tile_m, tile_n), jnp.float32)],
            compiler_params=pltpu.CompilerParams(
                dimension_semantics=("parallel", "parallel", "arbitrary"),
                vmem_limit_bytes=vmem_limit,
            ),
            cost_estimate=cost,
        )(x_flat, w_fused, b_fused)

    out = out_flat.reshape(T, B, n_pad)
    if n_out != n_pad:
        out = out[..., :n_out]   # single slice, only when lane padding was used
    return out


def parallel_linear(x, weights, biases, *, compute_dtype=None, **kwargs):
    """Convenience wrapper matching the original interface (re-fuses per call).

    Prefer fuse_parallel_params(...) once + parallel_linear_fused(...) per step.
    """
    compute_dtype = x.dtype if compute_dtype is None else compute_dtype
    w_fused, b_fused, n_out = fuse_parallel_params(
        weights, biases, compute_dtype=compute_dtype)
    return parallel_linear_fused(x, w_fused, b_fused, n_out, **kwargs)


# ------------------------ deterministic parameter init ----------------------
def _random_orthonormal(key, n, m=None):
    m = n if m is None else m
    assert m >= n
    x = jax.random.normal(key, (m, m), dtype=jnp.float32)
    Q, r = jnp.linalg.qr(x)
    flipper = jnp.diag(jnp.sign(jnp.diag(r)))
    square_orthog = Q @ flipper
    return square_orthog[:n, :]


def orthonormal_matrix(key, nrow, ncol):
    nrep = nrow // ncol
    blocks = []
    keys = jax.random.split(key, nrep + 1)
    for i in range(nrep):
        blocks.append(_random_orthonormal(keys[i], ncol))
    remsize = nrow - nrep * ncol
    if remsize > 0:
        blocks.append(_random_orthonormal(keys[nrep], remsize, ncol))
    return jnp.concatenate(blocks, axis=0).astype(jnp.float32)


def truncated_normal_init(key, size, sd):
    return (sd * jax.random.truncated_normal(key, -2.0, 2.0, (size,))).astype(jnp.float32)


# ---------------------------------- main -------------------------------------
if __name__ == "__main__":
    root = jax.random.PRNGKey(0)
    key1, key2 = jax.random.split(root)

    # --- Test 1: taiyaki-style Parallel of two linear sublayers, (T, B, C) ---
    T, B, C = 16, 8, 16
    sizes = (64, 64)                 # fused N = 128 (already lane-dense)
    kx, *ks = jax.random.split(key1, 1 + 2 * len(sizes))
    x = jax.random.normal(kx, (T, B, C), dtype=jnp.float32)
    weights = [orthonormal_matrix(ks[2 * i], s, C) for i, s in enumerate(sizes)]
    biases = [truncated_normal_init(ks[2 * i + 1], s, sd=0.5)
              for i, s in enumerate(sizes)]

    # Parameter fusion hoisted out of the forward path (done once).
    w_fused, b_fused, n_out = fuse_parallel_params(weights, biases)
    # tile_m=48 exercises the ragged last M block (no explicit pad/slice);
    # thresholds zeroed so the tiny demo exercises the Pallas path.
    out = parallel_linear_fused(x, w_fused, b_fused, n_out, tile_m=48,
                                min_pallas_rows=0, min_pallas_k=0)
    out = jax.block_until_ready(out)

    ref = jnp.concatenate([x @ W.T + b for W, b in zip(weights, biases)], axis=2)
    np.testing.assert_allclose(np.asarray(out), np.asarray(ref),
                               rtol=1e-5, atol=1e-5)

    # --- Test 2: exercises N lane-padding and the K-tiled accumulator path ---
    T2, B2, C2 = 4, 8, 256
    sizes2 = (100, 60)               # fused N = 160 -> padded to 256 lanes
    k2x, k2w0, k2b0, k2w1, k2b1 = jax.random.split(key2, 5)
    x2 = jax.random.normal(k2x, (T2, B2, C2), dtype=jnp.float32)
    weights2 = [jax.random.normal(k2w0, (sizes2[0], C2), jnp.float32) / np.sqrt(C2),
                jax.random.normal(k2w1, (sizes2[1], C2), jnp.float32) / np.sqrt(C2)]
    biases2 = [0.1 * jax.random.normal(k2b0, (sizes2[0],), jnp.float32),
               0.1 * jax.random.normal(k2b1, (sizes2[1],), jnp.float32)]
    w2, b2, n2 = fuse_parallel_params(weights2, biases2)
    out2 = parallel_linear_fused(x2, w2, b2, n2, tile_m=16, tile_n=128,
                                 tile_k=128, min_pallas_rows=0, min_pallas_k=0)
    out2 = jax.block_until_ready(out2)

    ref2 = jnp.concatenate([x2 @ W.T + b for W, b in zip(weights2, biases2)],
                           axis=2)
    # Looser tolerance: MXU f32 contraction precision over K=256.
    np.testing.assert_allclose(np.asarray(out2), np.asarray(ref2),
                               rtol=3e-2, atol=3e-2)

    print("KERNEL_OK")
</pallas_src>

<mosaic_0001>
module attributes {stable_mosaic.version = 11 : i64} {
  func.func @_parallel_linear_kernel(%arg0: i32, %arg1: i32, %arg2: memref<48x16xf32, #tpu.memory_space<vmem>>, %arg3: memref<16x128xf32, #tpu.memory_space<vmem>>, %arg4: memref<1x128xf32, #tpu.memory_space<vmem>>, %arg5: memref<48x128xf32, #tpu.memory_space<vmem>>) attributes {dimension_semantics = [#tpu.dimension_semantics<parallel>, #tpu.dimension_semantics<parallel>], iteration_bounds = array<i64: 3, 1>, scalar_prefetch = 0 : i64, scratch_operands = 0 : i64, tpu.core_type = #tpu.core_type<tc>, window_params = [{transform_indices = @transform_0, window_bounds = array<i64: 48, 16>}, {transform_indices = @transform_1, window_bounds = array<i64: 16, 128>}, {transform_indices = @transform_2, window_bounds = array<i64: 1, 128>}, {transform_indices = @transform_3, window_bounds = array<i64: 48, 128>}]} {
    %c0 = arith.constant 0 : index
    %c0_0 = arith.constant 0 : index
    %0 = vector.load %arg2[%c0, %c0_0] : memref<48x16xf32, #tpu.memory_space<vmem>>, vector<48x16xf32>
    %c0_1 = arith.constant 0 : index
    %c0_2 = arith.constant 0 : index
    %1 = vector.load %arg3[%c0_1, %c0_2] : memref<16x128xf32, #tpu.memory_space<vmem>>, vector<16x128xf32>
    %cst = arith.constant dense<0.000000e+00> : vector<48x128xf32>
    %2 = tpu.matmul %0, %1, %cst {dimension_numbers = #tpu.dot_dimension_numbers<[1], [0], [0], [1], [0, 0, 1, 1], [], []>} : vector<48x16xf32>, vector<16x128xf32>, vector<48x128xf32> -> vector<48x128xf32>
    %c0_3 = arith.constant 0 : index
    %c0_4 = arith.constant 0 : index
    %3 = vector.load %arg4[%c0_3, %c0_4] : memref<1x128xf32, #tpu.memory_space<vmem>>, vector<1x128xf32>
    %4 = vector.broadcast %3 : vector<1x128xf32> to vector<48x128xf32>
    %5 = arith.addf %2, %4 : vector<48x128xf32>
    %c0_5 = arith.constant 0 : index
    %c0_6 = arith.constant 0 : index
    %6 = vector.load %arg5[%c0_5, %c0_6] : memref<48x128xf32, #tpu.memory_space<vmem>>, vector<48x128xf32>
    tpu.vector_store %arg5[%c0_5, %c0_6], %5 {strides = array<i32>} : memref<48x128xf32, #tpu.memory_space<vmem>>, vector<48x128xf32>,
    return
  }
  func.func @transform_0(%arg0: i32, %arg1: i32) -> (i32, i32) {
    %c0_i32 = arith.constant 0 : i32
    %c0_i32_0 = arith.constant 0 : i32
    return %arg0, %c0_i32 : i32, i32
  }
  func.func @transform_1(%arg0: i32, %arg1: i32) -> (i32, i32) {
    %c0_i32 = arith.constant 0 : i32
    %c0_i32_0 = arith.constant 0 : i32
    return %c0_i32, %arg1 : i32, i32
  }
  func.func @transform_2(%arg0: i32, %arg1: i32) -> (i32, i32) {
    %c0_i32 = arith.constant 0 : i32
    %c0_i32_0 = arith.constant 0 : i32
    return %c0_i32, %arg1 : i32, i32
  }
  func.func @transform_3(%arg0: i32, %arg1: i32) -> (i32, i32) {
    %c0_i32 = arith.constant 0 : i32
    return %arg0, %arg1 : i32, i32
  }
}

</mosaic_0001>

<llo_original>
// kernel: tpu_custom_call.1
$region0: #{tpu_custom_call.1}
  #allocation0 [shape = 'u32[]', space=smem, size = 0x4, offset = 0x4, fixed_abs, tag = 'smem constant byte address 0x4 - core index']
  #allocation1 [shape = 'u32[144,128]{1,0:T(1,128)}', space=vmem, size = 0x12000, scoped, tag = 'internal scratch']
  %s0 = inlined_call_operand.vmem [shape: f32[128,16], index: 0, kind: input, shape index: {}]
  %s1 = inlined_call_operand.vmem [shape: f32[16,128], index: 1, kind: input, shape index: {}]
  %s2 = inlined_call_operand.vmem [shape: f32[1,128], index: 2, kind: input, shape index: {}]
  %s3 = inlined_call_operand.hbm [shape: f32[128,128], index: 3, kind: output, shape index: {}]
  %s4 = sld [smem:[#allocation0]]
  $region45: #{tpu_custom_call.1} parent=0
    _
  %s6 = ssub.s32 1, %s4
  %s7 = scalar_select 0, %s6, %s4
  $region1: #{tpu_custom_call.1} parent=0
    #allocation2 [shape = 'u8[49152]{0}', space=vmem, size = 0xc000, scoped, tag = 'output window, operand 0']
    #allocation3 [shape = 's32[2]{0}', space=sflag, size = 0x8, scoped, tag = 'scoped memory for tpu_custom_call.1']
    %8 = vsyncpa [#allocation3], 0
    %s9 = scalar_lea.sflag [#allocation3], 1
    %10 = vsyncpa %s9, 0
    loop: start=0, step=1, limit=5
    $region2: #{tpu_custom_call.1} parent=1 // loop_pre_header
      _
    $region3: #{tpu_custom_call.1} parent=1 // loop_header
      %s12 = sphi 0, %s16
      %p13 = scmp.ge.s32.totalorder %s12, 5
      %s19 = sphi 0, %s31
      %s20 = sphi 0, %s27
      %s21 = sphi 0, %s19
      %s22 = sphi 0, %s20
      %s23 = sphi 0, %s21
      %s24 = sphi 0, %s22
      %s34 = sphi 0, %s36
      %s37 = sphi 0, %s34
      %s38 = sphi 0, %s37
      %s54 = sphi 0, %s38
      %s60 = sphi 0, %s62
      %s63 = sphi 0, %s60
      %s64 = sphi 0, %s63
      %s80 = sphi 0, %s64
      %s86 = sphi 0, %s88
      %s89 = sphi 0, %s86
      %s90 = sphi 0, %s89
      %s106 = sphi 0, %s90
      %s114 = sphi 0, %s116
      %s117 = sphi 0, %s114
      %s118 = sphi 0, %s117
      %s134 = sphi 0, %s118
    $region4: #{tpu_custom_call.1} parent=1 // loop_header_branch
      %15 = sbr.rel (%p13) target = $region8
    $region5: #{tpu_custom_call.1} parent=1 // loop_body
      %s17 = ssub.s32 %s12, 1
      %s18 = ssub.s32 %s12, 2
      %s25 = sadd.s32 1, %s20
      %p26 = scmp.ge.s32.totalorder %s25, 1
      %s27 = scalar_select %p26, 0, %s25
      %s28 = sadd.s32 1, %s19
      %s29 = scalar_select %p26, %s28, %s19
      %p30 = scmp.ge.s32.totalorder %s29, 3
      %s31 = scalar_select %p30, 0, %s29
      %s32 = ssub.s32 %s19, %s31
      %p33 = scmp.eq.s32.totalorder %s32, 0
      %s35 = sadd.s32 %s34, 1
      %s36 = scalar_select %p33, %s34, %s35
      %p39 = pneg %p33
      %p40 = scmp.eq.s32.totalorder %s12, 2
      %p41 = por %p39, %p40
      %p42 = scmp.ne.s32.totalorder %s34, %s37
      %p43 = scmp.eq.s32.totalorder %s12, 0
      %p44 = por %p42, %p43
      %p45 = scmp.ne.s32.totalorder %s34, %s37
      %p46 = scmp.eq.s32.totalorder %s17, 2
      %p47 = por %p45, %p46
      %p48 = scmp.ne.s32.totalorder %s37, %s38
      %p49 = scmp.eq.s32.totalorder %s17, 0
      %p50 = por %p48, %p49
      %p51 = scmp.ne.s32.totalorder %s37, %s38
      %p52 = scmp.eq.s32.totalorder %s18, 2
      %p53 = por %p51, %p52
      %p55 = scmp.ne.s32.totalorder %s38, %s54
      %p56 = scmp.eq.s32.totalorder %s18, 0
      %p57 = por %p55, %p56
      %s58 = ssub.s32 %s20, %s27
      %p59 = scmp.eq.s32.totalorder %s58, 0
      %s61 = sadd.s32 %s60, 1
      %s62 = scalar_select %p59, %s60, %s61
      %p65 = pneg %p59
      %p66 = scmp.eq.s32.totalorder %s12, 2
      %p67 = por %p65, %p66
      %p68 = scmp.ne.s32.totalorder %s60, %s63
      %p69 = scmp.eq.s32.totalorder %s12, 0
      %p70 = por %p68, %p69
      %p71 = scmp.ne.s32.totalorder %s60, %s63
      %p72 = scmp.eq.s32.totalorder %s17, 2
      %p73 = por %p71, %p72
      %p74 = scmp.ne.s32.totalorder %s63, %s64
      %p75 = scmp.eq.s32.totalorder %s17, 0
      %p76 = por %p74, %p75
      %p77 = scmp.ne.s32.totalorder %s63, %s64
      %p78 = scmp.eq.s32.totalorder %s18, 2
      %p79 = por %p77, %p78
      %p81 = scmp.ne.s32.totalorder %s64, %s80
      %p82 = scmp.eq.s32.totalorder %s18, 0
      %p83 = por %p81, %p82
      %s84 = ssub.s32 %s20, %s27
      %p85 = scmp.eq.s32.totalorder %s84, 0
      %s87 = sadd.s32 %s86, 1
      %s88 = scalar_select %p85, %s86, %s87
      %p91 = pneg %p85
      %p92 = scmp.eq.s32.totalorder %s12, 2
      %p93 = por %p91, %p92
      %p94 = scmp.ne.s32.totalorder %s86, %s89
      %p95 = scmp.eq.s32.totalorder %s12, 0
      %p96 = por %p94, %p95
      %p97 = scmp.ne.s32.totalorder %s86, %s89
      %p98 = scmp.eq.s32.totalorder %s17, 2
      %p99 = por %p97, %p98
      %p100 = scmp.ne.s32.totalorder %s89, %s90
      %p101 = scmp.eq.s32.totalorder %s17, 0
      %p102 = por %p100, %p101
      %p103 = scmp.ne.s32.totalorder %s89, %s90
      %p104 = scmp.eq.s32.totalorder %s18, 2
      %p105 = por %p103, %p104
      %p107 = scmp.ne.s32.totalorder %s90, %s106
      %p108 = scmp.eq.s32.totalorder %s18, 0
      %p109 = por %p107, %p108
      %s110 = ssub.s32 %s19, %s31
      %s111 = ssub.s32 %s20, %s27
      %s112 = sor.u32 %s110, %s111
      %p113 = scmp.eq.s32.totalorder %s112, 0
      %s115 = sadd.s32 %s114, 1
      %s116 = scalar_select %p113, %s114, %s115
      %p119 = pneg %p113
      %p120 = scmp.eq.s32.totalorder %s12, 2
      %p121 = por %p119, %p120
      %p122 = scmp.ne.s32.totalorder %s114, %s117
      %p123 = scmp.eq.s32.totalorder %s12, 0
      %p124 = por %p122, %p123
      %p125 = scmp.ne.s32.totalorder %s114, %s117
      %p126 = scmp.eq.s32.totalorder %s17, 2
      %p127 = por %p125, %p126
      %p128 = scmp.ne.s32.totalorder %s117, %s118
      %p129 = scmp.eq.s32.totalorder %s17, 0
      %p130 = por %p128, %p129
      %p131 = scmp.ne.s32.totalorder %s117, %s118
      %p132 = scmp.eq.s32.totalorder %s18, 2
      %p133 = por %p131, %p132
      %p135 = scmp.ne.s32.totalorder %s118, %s134
      %p136 = scmp.eq.s32.totalorder %s18, 0
      %p137 = por %p135, %p136
      %p138 = scmp.le.s32.totalorder 1, %s12
      %p139 = scmp.lt.s32.totalorder %s12, 4
      %p140 = pnand %p138, %p139
      %p141 = pneg %p140
      // Predicated region
      $region9: #{tpu_custom_call.1} parent=5 // pred_check
        _
      $region10: #{tpu_custom_call.1} parent=5 // pred_check_branch
        %143 = sbr.rel (%p140) target = $region12
      $region11: #{tpu_custom_call.1} parent=5 // pred_region
        %s144 = ssub.s32 %s12, 1
        // Predicated region
        $region13: #{tpu_custom_call.1} parent=11 // pred_check
          %p145 = pneg %p76
        $region14: #{tpu_custom_call.1} parent=11 // pred_check_branch
          %147 = sbr.rel (%p145) target = $region16
        $region15: #{tpu_custom_call.1} parent=11 // pred_region
          %p148 = scmp.lt.s32.totalorder %s22, 0
          %s149 = scalar_select %p148, %s22, 0
          %s150 = smul.addr %s149, 8
          %s151 = scalar_lea.vmem %s1, %s150
        $region16: #{tpu_custom_call.1} parent=11 // pred_fallthru
          _
        // Predicated region
        $region17: #{tpu_custom_call.1} parent=11 // pred_check
          %p152 = pneg %p102
        $region18: #{tpu_custom_call.1} parent=11 // pred_check_branch
          %154 = sbr.rel (%p152) target = $region20
        $region19: #{tpu_custom_call.1} parent=11 // pred_region
          %p155 = scmp.lt.s32.totalorder %s22, 0
          %s156 = scalar_select %p155, %s22, 0
          %s157 = scalar_lea.vmem %s2, %s156
        $region20: #{tpu_custom_call.1} parent=11 // pred_fallthru
          _
      $region12: #{tpu_custom_call.1} parent=5 // pred_fallthru
        _
      %p158 = scmp.lt.s32.totalorder %s12, 3
      // Predicated region
      $region21: #{tpu_custom_call.1} parent=5 // pred_check
        %p159 = pneg %p158
      $region22: #{tpu_custom_call.1} parent=5 // pred_check_branch
        %161 = sbr.rel (%p159) target = $region24
      $region23: #{tpu_custom_call.1} parent=5 // pred_region
        // Predicated region
        $region25: #{tpu_custom_call.1} parent=23 // pred_check
          %p162 = pneg %p44
        $region26: #{tpu_custom_call.1} parent=23 // pred_check_branch
          %164 = sbr.rel (%p162) target = $region28
        $region27: #{tpu_custom_call.1} parent=23 // pred_region
          %s165 = smul.u32 6, %s19
          %s166 = ssub.s32 16, %s165
          %p167 = scmp.lt.s32.totalorder %s166, 6
          %s168 = scalar_select %p167, %s166, 6
          %s169 = smul.u32 128, %s168
          %p170 = scmp.lt.s32.totalorder %s165, 15
          %s171 = scalar_select %p170, %s165, 15
          %s172 = smul.addr %s171, 8
          %s173 = scalar_lea.vmem %s0, %s172
          %s174 = smul.u32 6, %s19
          %s175 = ssub.s32 16, %s174
          %p176 = scmp.lt.s32.totalorder %s175, 6
          %s177 = scalar_select %p176, %s175, 6
          %s178 = smul.u32 128, %s177
        $region28: #{tpu_custom_call.1} parent=23 // pred_fallthru
          _
      $region24: #{tpu_custom_call.1} parent=5 // pred_fallthru
        _
      %p179 = scmp.le.s32.totalorder 1, %s12
      %p180 = scmp.lt.s32.totalorder %s12, 4
      %p181 = pnand %p179, %p180
      %p182 = pneg %p181
      // Predicated region
      $region29: #{tpu_custom_call.1} parent=5 // pred_check
        _
      $region30: #{tpu_custom_call.1} parent=5 // pred_check_branch
        %184 = sbr.rel (%p181) target = $region32
      $region31: #{tpu_custom_call.1} parent=5 // pred_region
        %s185 = ssub.s32 %s12, 1
        %s186 = smul.u32 6, %s21
        %s187 = ssub.s32 16, %s186
        %p188 = scmp.lt.s32.totalorder %s187, 6
        %s189 = scalar_select %p188, %s187, 6
        %s190 = smul.u32 128, %s189
        %p191 = scmp.lt.s32.totalorder %s186, 15
        %s192 = scalar_select %p191, %s186, 15
        %s193 = smul.addr %s192, 8
        %s194 = scalar_lea.vmem %s0, %s193
        %p195 = pneg %p50
        %p196 = pneg %p47
        %p197 = scmp.lt.s32.totalorder %s22, 0
        %s198 = scalar_select %p197, %s22, 0
        %s199 = smul.addr %s198, 8
        %s200 = scalar_lea.vmem %s1, %s199
        %p201 = pneg %p76
        %p202 = pneg %p73
        %p203 = scmp.lt.s32.totalorder %s22, 0
        %s204 = scalar_select %p203, %s22, 0
        %s205 = scalar_lea.vmem %s2, %s204
        %p206 = pneg %p102
        %p207 = pneg %p99
        %p208 = pneg %p130
        %p209 = pneg %p127
        %s210 = sand.u32 %s117, 1
        %s211 = scalar_lea.sflag [#allocation3], %s210
        %s212 = sand.u32 %s117, 1
        %s213 = smul.addr %s212, 48
        %s214 = scalar_lea.vmem [#allocation2], %s213
        %s215 = smul.u32 6, %s21
        %s216 = ssub.s32 16, %s215
        %p217 = scmp.lt.s32.totalorder %s216, 6
        %s218 = scalar_select %p217, %s216, 6
        %s219 = smul.u32 128, %s218
        %p220 = scmp.lt.s32.totalorder %s215, 15
        %s221 = scalar_select %p220, %s215, 15
        %s222 = smul.addr %s221, 8
        %s223 = scalar_lea.vmem %s0, %s222
        %s224 = smul.u32 6, %s21
        %s225 = ssub.s32 16, %s224
        %p226 = scmp.lt.s32.totalorder %s225, 6
        %s227 = scalar_select %p226, %s225, 6
        %s228 = smul.u32 128, %s227
        %p229 = scmp.lt.s32.totalorder %s22, 0
        %s230 = scalar_select %p229, %s22, 0
        %s231 = smul.addr %s230, 8
        %s232 = scalar_lea.vmem %s1, %s231
        %p233 = scmp.lt.s32.totalorder %s22, 0
        %s234 = scalar_select %p233, %s22, 0
        %s235 = scalar_lea.vmem %s2, %s234
        %s236 = smul.u32 6, %s21
        %s237 = ssub.s32 16, %s236
        %p238 = scmp.lt.s32.totalorder %s237, 6
        %s239 = scalar_select %p238, %s237, 6
        %s240 = smul.u32 128, %s239
        %v241 = vld [vmem:[%s223] sm:$0xff]
        %v242 = vld [vmem:[%s223 + $0x8] sm:$0xff]
        %v243 = vld [vmem:[%s223 + $0x10] sm:$0xff]
        %v244 = vld [vmem:[%s223 + $0x18] sm:$0xff]
        %v245 = vld [vmem:[%s223 + $0x20] sm:$0xff]
        %v246 = vld [vmem:[%s223 + $0x28] sm:$0xff]
        %v247 = vld [vmem:[%s232] sm:$0xff]
        %v248 = vld [vmem:[%s232 + $0x8] sm:$0xff]
        %v249 = vld [vmem:[%s235] sm:$0x1]
        %v251 = vlaneseq
        %v252 = vshrl.u32 %v251, 7
        %v253 = vsub.s32 0, %v252
        %v254 = vrot.slane %v249, %v253
        %vm256 = vcmask 130048
        %v258 = vsel %vm256, %v241, 0
        %v261 = vsel %vm256, %v242, 0
        %v264 = vsel %vm256, %v243, 0
        %v267 = vsel %vm256, %v244, 0
        %v270 = vsel %vm256, %v245, 0
        %v273 = vsel %vm256, %v246, 0
        %275 = vmatprep.subr.mxu0 0.0
        %276 = vmatpush1.msra.mxu0 0.0
        %277 = vmatprep.subr.mxu0 0.0
        %278 = vmatpush1.msra.mxu0 0.0
        %279 = vmatprep.subr.mxu0 0.0
        %280 = vmatpush1.msra.mxu0 0.0
        %281 = vmatprep.subr.mxu0 0.0
        %282 = vmatpush1.msra.mxu0 0.0
        %283 = vmatprep.subr.mxu0 0.0
        %284 = vmatpush1.msra.mxu0 0.0
        %285 = vmatprep.subr.mxu0 0.0
        %286 = vmatpush1.msra.mxu0 0.0
        %287 = vmatprep.subr.mxu0 0.0
        %288 = vmatpush1.msra.mxu0 0.0
        %289 = vmatprep.subr.mxu0 0.0
        %290 = vmatpush1.msra.mxu0 0.0
        %291 = vmatprep.subr.mxu0 0.0
        %292 = vmatpush1.msra.mxu0 0.0
        %293 = vmatprep.subr.mxu0 0.0
        %294 = vmatpush1.msra.mxu0 0.0
        %295 = vmatprep.subr.mxu0 0.0
        %296 = vmatpush1.msra.mxu0 0.0
        %297 = vmatprep.subr.mxu0 0.0
        %298 = vmatpush1.msra.mxu0 0.0
        %299 = vmatprep.subr.mxu0 0.0
        %300 = vmatpush1.msra.mxu0 0.0
        %301 = vmatprep.subr.mxu0 0.0
        %302 = vmatpush1.msra.mxu0 0.0
        %303 = vmatprep.subr.mxu0 0.0
        %304 = vmatpush1.msra.mxu0 %v248
        %305 = vmatprep.subr.mxu0 0.0
        %306 = vmatpush1.msra.mxu0 %v247
        %307 = vmatprep.subr.mxu0 0.0
        %308 = vmatpush2.msra.mxu0 0.0
        %309 = vmatprep.subr.mxu0 0.0
        %310 = vmatpush2.msra.mxu0 0.0
        %311 = vmatprep.subr.mxu0 0.0
        %312 = vmatpush2.msra.mxu0 0.0
        %313 = vmatprep.subr.mxu0 0.0
        %314 = vmatpush2.msra.mxu0 0.0
        %315 = vmatprep.subr.mxu0 0.0
        %316 = vmatpush2.msra.mxu0 0.0
        %317 = vmatprep.subr.mxu0 0.0
        %318 = vmatpush2.msra.mxu0 0.0
        %319 = vmatprep.subr.mxu0 0.0
        %320 = vmatpush2.msra.mxu0 0.0
        %321 = vmatprep.subr.mxu0 0.0
        %322 = vmatpush2.msra.mxu0 0.0
        %323 = vmatprep.subr.mxu0 0.0
        %324 = vmatpush2.msra.mxu0 0.0
        %325 = vmatprep.subr.mxu0 0.0
        %326 = vmatpush2.msra.mxu0 0.0
        %327 = vmatprep.subr.mxu0 0.0
        %328 = vmatpush2.msra.mxu0 0.0
        %329 = vmatprep.subr.mxu0 0.0
        %330 = vmatpush2.msra.mxu0 0.0
        %331 = vmatprep.subr.mxu0 0.0
        %332 = vmatpush2.msra.mxu0 0.0
        %333 = vmatprep.subr.mxu0 0.0
        %334 = vmatpush2.msra.mxu0 0.0
        %335 = vmatprep.subr.mxu0 0.0
        %336 = vmatpush2.msra.mxu0 0.0
        %337 = vmatprep.subr.mxu0 0.0
        %338 = vmatpush2.msra.mxu0 0.0
        %339 = vmatprep.mubr.f32.mxu0 0.0
        %340 = vmatmul.mubr.f32.gmra.mxu0 %v258
        %v341 = vpop.f32.mrf.mxu0
        %v342 = vadd.f32 %v254, %v341
        %v343 = vpop.f32.mrf.mxu0
        %344 = vmatprep.mubr.f32.mxu0 0.0
        %345 = vmatmul.mubr.f32.gmra.mxu0 %v261
        %v346 = vpop.f32.mrf.mxu0
        %v347 = vadd.f32 %v254, %v346
        %v348 = vpop.f32.mrf.mxu0
        %349 = vmatprep.mubr.f32.mxu0 0.0
        %350 = vmatmul.mubr.f32.gmra.mxu0 %v264
        %v351 = vpop.f32.mrf.mxu0
        %v352 = vadd.f32 %v254, %v351
        %v353 = vpop.f32.mrf.mxu0
        %354 = vmatprep.mubr.f32.mxu0 0.0
        %355 = vmatmul.mubr.f32.gmra.mxu0 %v267
        %v356 = vpop.f32.mrf.mxu0
        %v357 = vadd.f32 %v254, %v356
        %v358 = vpop.f32.mrf.mxu0
        %359 = vmatprep.mubr.f32.mxu0 0.0
        %360 = vmatmul.mubr.f32.gmra.mxu0 %v270
        %v361 = vpop.f32.mrf.mxu0
        %v362 = vadd.f32 %v254, %v361
        %v363 = vpop.f32.mrf.mxu0
        %364 = vmatprep.mubr.f32.mxu0 0.0
        %365 = vmatmul.mubr.f32.gmra.mxu0 %v273
        %v366 = vpop.f32.mrf.mxu0
        %v367 = vadd.f32 %v254, %v366
        %v368 = vpop.f32.mrf.mxu0
        %369 = vdwg.mxu0
        %370 = vst [vmem:[%s214] sm:$0xff] %v342
        %371 = vst [vmem:[%s214 + $0x8] sm:$0xff] %v347
        %372 = vst [vmem:[%s214 + $0x10] sm:$0xff] %v352
        %373 = vst [vmem:[%s214 + $0x18] sm:$0xff] %v357
        %374 = vst [vmem:[%s214 + $0x20] sm:$0xff] %v362
        %375 = vst [vmem:[%s214 + $0x28] sm:$0xff] %v367
        %s376 = sand.u32 %s117, 1
        %s377 = scalar_lea.sflag [#allocation3], %s376
        %s378 = sand.u32 %s117, 1
        %s379 = smul.addr %s378, 48
        %s380 = scalar_lea.vmem [#allocation2], %s379
        // Predicated region
        $region33: #{tpu_custom_call.1} parent=31 // pred_check
          %p381 = pneg %p127
        $region34: #{tpu_custom_call.1} parent=31 // pred_check_branch
          %383 = sbr.rel (%p381) target = $region36
        $region35: #{tpu_custom_call.1} parent=31 // pred_region
          %s384 = smul.u32 6, %s21
          %s385 = ssub.s32 16, %s384
          %p386 = scmp.lt.s32.totalorder %s385, 6
          %s387 = scalar_select %p386, %s385, 6
          %s388 = smul.u32 128, %s387
          %s390 = ssub.s32 768, %s388
          %391 = vsyncadd %s377, %s390
          %p392 = scmp.ne.s32.totalorder 0, %s388
          %s393 = sadd.s32 %s22, %s384
          %s394 = smul.addr %s393, 128
          %s395 = scalar_lea.hbm %s3, %s394
          %s396 = smul.u32 8, %s387
          %s397 = sshll.u32 %s380, 4
          %s398 = int_to_ptr.vmem [resolvable:$true] %s397
          %s399 = sshll.u32 %s396, 4
          %403 = dma.vmem_to_hbm [thread:$0]  (%p392), %s398, %s399, %s395, %s377, 128, 128, 8
        $region36: #{tpu_custom_call.1} parent=31 // pred_fallthru
          _
      $region32: #{tpu_custom_call.1} parent=5 // pred_fallthru
        _
      %p404 = scmp.le.s32.totalorder 2, %s12
      // Predicated region
      $region37: #{tpu_custom_call.1} parent=5 // pred_check
        %p405 = pneg %p404
      $region38: #{tpu_custom_call.1} parent=5 // pred_check_branch
        %407 = sbr.rel (%p405) target = $region40
      $region39: #{tpu_custom_call.1} parent=5 // pred_region
        %s408 = ssub.s32 %s12, 2
        // Predicated region
        $region41: #{tpu_custom_call.1} parent=39 // pred_check
          %p409 = pneg %p133
        $region42: #{tpu_custom_call.1} parent=39 // pred_check_branch
          %411 = sbr.rel (%p409) target = $region44
        $region43: #{tpu_custom_call.1} parent=39 // pred_region
          %s412 = sand.u32 %s118, 1
          %s413 = scalar_lea.sflag [#allocation3], %s412
          %s414 = sand.u32 %s118, 1
          %s415 = smul.addr %s414, 48
          %s416 = scalar_lea.vmem [#allocation2], %s415
          %417 = dma.done %s413, 768
        $region44: #{tpu_custom_call.1} parent=39 // pred_fallthru
          _
      $region40: #{tpu_custom_call.1} parent=5 // pred_fallthru
        _
    $region6: #{tpu_custom_call.1} parent=1 // loop_footer
      %s16 = sadd.s32 1, %s12
    $region7: #{tpu_custom_call.1} parent=1 // loop_footer_branch
      %11 = sbr.rel target = $region3
    $region8: #{tpu_custom_call.1} parent=1 // loop_exit
      _
    %418 = vsyncpa [#allocation3], 1
    %s419 = scalar_lea.sflag [#allocation3], 1
    %420 = vsyncpa %s419, 1

</llo_original>
